<compile_context>
chip_gen: v7x
topology: tpu7x:2x2x1
jax: 0.10.0
libtpu: 0.0.40
codegen_flags: <defaults>
</compile_context>

<pallas_src>
import jax
import jax.numpy as jnp
import numpy as np
from jax.experimental import pallas as pl
from jax.experimental.pallas import tpu as pltpu


# -----------------------------------------------------------------------------
# Fused Up kernel: one batch-block (nb elements stacked in the row/M dim) per step
# -----------------------------------------------------------------------------
def up_kernel(x2p_ref, x1_ref, uy_ref, wpk_ref, b1_ref, m2_ref, b2_ref, mask_ref,
              o_ref, xp, y1p):
    R = o_ref.shape[1]          # nb*(H+2): stacked conv row count
    WCo = o_ref.shape[2]        # W*Cout (lane-dense, 128)
    WC2 = x2p_ref.shape[2]      # W*C2  (skip-connection lane width)
    Kc = xp.shape[1]            # W*C2 + W1*C1 (packed conv1 K)

    # ---- pack conv1 operand: [pre-padded x2 | fused upsample+pad of x1] ------
    # x2 already carries its conv zero rows (padded in the wrapper by XLA).
    xp[:, 0:WC2] = x2p_ref[0]
    # Bilinear row-interp + F.pad + conv row-pad of x1 in ONE matmul (Uy_big is
    # block-diagonal over the nb stacked elements and contains the zero pad rows);
    # the column interpolation (UxC) is folded offline into the conv weights.
    xp[:, WC2:Kc] = jnp.dot(uy_ref[...], x1_ref[0],
                            preferred_element_type=jnp.float32).astype(xp.dtype)

    # ---- conv1 (+ folded BN scale): 3 row-shifted lane-dense bf16 matmuls -----
    acc = jnp.zeros((R, WCo), jnp.float32)
    for dy in range(3):                     # static unroll
        acc = acc + jnp.dot(xp[dy:dy + R, :], wpk_ref[dy],
                            preferred_element_type=jnp.float32)
    # bias + ReLU epilogue in f32; mask kills the junk rows at element boundaries
    # and simultaneously writes the zero conv-pad rows needed by conv2.
    y1 = jnp.maximum(acc + b1_ref[...], 0.0) * mask_ref[...]

    # ---- intermediate stays in VMEM (bf16), re-padded for conv2 --------------
    y1p[0:1, :] = jnp.zeros((1, WCo), y1p.dtype)
    y1p[R + 1:R + 2, :] = jnp.zeros((1, WCo), y1p.dtype)
    y1p[1:R + 1, :] = y1.astype(y1p.dtype)

    # ---- conv2 (+ folded BN scale) --------------------------------------------
    acc2 = jnp.zeros((R, WCo), jnp.float32)
    for dy in range(3):
        acc2 = acc2 + jnp.dot(y1p[dy:dy + R, :], m2_ref[dy],
                              preferred_element_type=jnp.float32)
    # Single lane-dense store; junk rows are sliced off in the wrapper.
    o_ref[0] = jnp.maximum(acc2 + b2_ref[...], 0.0)


# -----------------------------------------------------------------------------
# Constant-matrix builders (one-time transforms of tiny weights, in the wrapper)
# -----------------------------------------------------------------------------
def _bilinear_matrix_1d(n_in, n_out):
    """align_corners=True interpolation matrix of shape (n_out, n_in)."""
    A = np.zeros((n_out, n_in), np.float32)
    if n_in == 1:
        A[:, 0] = 1.0
        return A
    for i in range(n_out):
        s = i * (n_in - 1) / (n_out - 1) if n_out > 1 else 0.0
        i0 = min(int(np.floor(s)), n_in - 1)
        i1 = min(i0 + 1, n_in - 1)
        f = s - i0
        A[i, i0] += 1.0 - f
        A[i, i1] += f
    return A


def _upsample_pad_matrices(H1, W1, C1, H, W):
    """UyB: (H+2, H1) per-element row-interp matrix in 'layout B'
            (rows 0,1 are zero = conv pad, row 2+h = interp for output row h,
             F.pad top offset folded in).
       UxC: (W1*C1, W*C1) per-channel column interp incl. F.pad left offset."""
    Ho, Wo = 2 * H1, 2 * W1
    pad_top = (H - Ho) // 2
    pad_left = (W - Wo) // 2
    Ay = _bilinear_matrix_1d(H1, Ho)     # (Ho, H1)
    Ax = _bilinear_matrix_1d(W1, Wo)     # (Wo, W1)

    UyB = np.zeros((H + 2, H1), np.float32)
    for h in range(H):
        u = h - pad_top
        if 0 <= u < Ho:
            UyB[h + 2] = Ay[u]

    Ux = np.zeros((W, W1), np.float32)
    for w in range(W):
        v = w - pad_left
        if 0 <= v < Wo:
            Ux[w] = Ax[v]
    UxC = np.kron(Ux.T, np.eye(C1, dtype=np.float32))   # (W1*C1, W*C1)
    return jnp.asarray(UyB), jnp.asarray(UxC)


def _conv_band_matrix(w_yxio, W):
    """3x3 SAME conv as banded matrices: M (3, W*Cin, W*Cout);
       out(H, W*Cout) = sum_dy Xrowpad[dy:dy+H, :] @ M[dy]."""
    Cin, Cout = int(w_yxio.shape[2]), int(w_yxio.shape[3])
    E = np.zeros((3, W, W), np.float32)
    for dx in range(3):
        for w in range(W):
            j = w + dx - 1
            if 0 <= j < W:
                E[dx, j, w] = 1.0
    M = jnp.einsum('yxio,xjw->yjiwo', w_yxio, jnp.asarray(E))
    return M.reshape(3, W * Cin, W * Cout)


# -----------------------------------------------------------------------------
# Parameters (deterministic, synthetic) + one-time kernel-side preprocessing
# -----------------------------------------------------------------------------
def init_up_params(c_in, c_out, key):
    ks = jax.random.split(key, 10)
    eps = 1e-5

    def bn_fold(kg, kb, km, kv, c):
        gamma = 1.0 + 0.1 * jax.random.normal(kg, (c,), jnp.float32)
        beta = 0.1 * jax.random.normal(kb, (c,), jnp.float32)
        mean = 0.1 * jax.random.normal(km, (c,), jnp.float32)
        var = 0.5 + jax.random.uniform(kv, (c,), jnp.float32)
        scale = gamma / jnp.sqrt(var + eps)
        bias = beta - mean * scale
        return scale, bias

    w1_oihw = 0.1 * jax.random.normal(ks[0], (c_out, c_in, 3, 3), jnp.float32)
    w2_oihw = 0.1 * jax.random.normal(ks[1], (c_out, c_out, 3, 3), jnp.float32)
    s1, b1 = bn_fold(ks[2], ks[3], ks[4], ks[5], c_out)
    s2, b2 = bn_fold(ks[6], ks[7], ks[8], ks[9], c_out)
    return dict(w1_oihw=w1_oihw, w2_oihw=w2_oihw, s1=s1, b1=b1, s2=s2, b2=b2)


def prepare_up(params, x1_shape_nchw, x2_shape_nchw):
    _, C1, H1, W1 = x1_shape_nchw
    _, C2, H, W = x2_shape_nchw
    Cout = int(params["w1_oihw"].shape[0])

    UyB, UxC = _upsample_pad_matrices(H1, W1, C1, H, W)

    # OIHW -> (ky, kx, Cin, Cout); fold BN scale into output channels.
    w1 = jnp.transpose(params["w1_oihw"], (2, 3, 1, 0)) * params["s1"]
    w2 = jnp.transpose(params["w2_oihw"], (2, 3, 1, 0)) * params["s2"]
    # torch.cat([x2, x1], dim=1): first C2 input channels are x2, last C1 are x1.
    M1a = _conv_band_matrix(w1[:, :, :C2, :], W)          # (3, W*C2, W*Cout)
    M1b = _conv_band_matrix(w1[:, :, C2:, :], W)          # (3, W*C1, W*Cout)
    # Fold the column-interpolation into the x1-branch weights and K-concatenate
    # with the x2-branch weights: one (W*C2 + W1*C1, W*Cout) matmul per dy tap.
    N1b = jnp.einsum('ij,djo->dio', UxC, M1b)             # (3, W1*C1, W*Cout)
    Wpk = jnp.concatenate([M1a, N1b], axis=1).astype(jnp.bfloat16)
    M2 = _conv_band_matrix(w2, W).astype(jnp.bfloat16)    # (3, W*Cout, W*Cout)
    b1t = jnp.tile(params["b1"], W).reshape(1, W * Cout)
    b2t = jnp.tile(params["b2"], W).reshape(1, W * Cout)
    return dict(UyB=UyB, Wpk=Wpk, M2=M2, b1t=b1t, b2t=b2t,
                dims=(C1, C2, Cout, H1, W1, H, W))


# -----------------------------------------------------------------------------
# Up.forward  (NCHW in / NCHW out, like PyTorch)
# -----------------------------------------------------------------------------
def up_forward(x1_nchw, x2_nchw, prep, nb=None):
    C1, C2, Cout, H1, W1, H, W = prep["dims"]
    N = x1_nchw.shape[0]
    if nb is None:
        nb = N          # whole batch per grid step (best on single-TC v5e/v6e);
                        # on v7x prefer nb = N // 2 to keep 2 "parallel" steps.
    assert N % nb == 0
    NB = N // nb
    P = H + 2
    R = nb * P
    WC2, WCo, W1C1 = W * C2, W * Cout, W1 * C1

    # NCHW -> NHWC -> lane-dense (rows, W*C); activations to bf16 for the MXU.
    x1 = jnp.transpose(x1_nchw, (0, 2, 3, 1)).astype(jnp.float32).reshape(N, H1, W1C1)
    x2 = jnp.transpose(x2_nchw, (0, 2, 3, 1)).astype(jnp.bfloat16).reshape(N, H, WC2)

    # Pre-pad x2 with the conv zero rows (2 leading per element) and stack nb
    # elements per grid step; 2 trailing zero rows feed the shifted conv taps.
    x2p = jnp.pad(x2, ((0, 0), (2, 0), (0, 0)))            # (N, P, W*C2)
    x2p = x2p.reshape(NB, R, WC2)
    x2p = jnp.pad(x2p, ((0, 0), (0, 2), (0, 0)))           # (NB, R+2, W*C2)

    x1f = x1.reshape(NB, nb * H1, W1C1)                    # stacked low-res x1

    # Block-diagonal row-interp matrix over the nb stacked elements (+2 zero rows).
    Uy_big = jnp.kron(jnp.eye(nb, dtype=jnp.float32), prep["UyB"])   # (R, nb*H1)
    Uy_big = jnp.concatenate(
        [Uy_big, jnp.zeros((2, nb * H1), jnp.float32)], axis=0)      # (R+2, nb*H1)

    # Valid-row mask: row r is a real conv-output row iff 1 <= (r mod P) <= H.
    rm = np.arange(R) % P
    mask = jnp.asarray(((rm >= 1) & (rm <= H)).astype(np.float32).reshape(R, 1))

    out = pl.pallas_call(
        up_kernel,
        out_shape=jax.ShapeDtypeStruct((NB, R, WCo), jnp.float32),
        grid=(NB,),
        in_specs=[
            pl.BlockSpec((1, R + 2, WC2), lambda s: (s, 0, 0)),        # x2 (pre-padded)
            pl.BlockSpec((1, nb * H1, W1C1), lambda s: (s, 0, 0)),     # x1 (low-res)
            pl.BlockSpec((R + 2, nb * H1), lambda s: (0, 0)),          # Uy_big
            pl.BlockSpec((3, WC2 + W1C1, WCo), lambda s: (0, 0, 0)),   # packed conv1 W
            pl.BlockSpec((1, WCo), lambda s: (0, 0)),                  # bias1 (tiled)
            pl.BlockSpec((3, WCo, WCo), lambda s: (0, 0, 0)),          # conv2 W
            pl.BlockSpec((1, WCo), lambda s: (0, 0)),                  # bias2 (tiled)
            pl.BlockSpec((R, 1), lambda s: (0, 0)),                    # valid-row mask
        ],
        out_specs=pl.BlockSpec((1, R, WCo), lambda s: (s, 0, 0)),
        scratch_shapes=[
            pltpu.VMEM((R + 2, WC2 + W1C1), jnp.bfloat16),   # packed conv1 operand
            pltpu.VMEM((R + 2, WCo), jnp.bfloat16),          # row-padded conv1 output
        ],
        compiler_params=pltpu.CompilerParams(dimension_semantics=("parallel",)),
    )(x2p, x1f, Uy_big, prep["Wpk"], prep["b1t"], prep["M2"], prep["b2t"], mask)

    # Drop the 2 junk/pad rows per element (XLA slice) and restore NCHW.
    out = out.reshape(NB, nb, P, WCo)[:, :, 1:H + 1, :].reshape(N, H, W, Cout)
    return jnp.transpose(out, (0, 3, 1, 2))


# -----------------------------------------------------------------------------
# Pure-JAX reference (independent path, for correctness check)
# -----------------------------------------------------------------------------
def bilinear_upsample_x2_align_corners(x):   # x: (N,H,W,C)
    N, H, W, C = x.shape
    Ho, Wo = 2 * H, 2 * W

    def coords(n_in, n_out):
        if n_in == 1:
            z = jnp.zeros((n_out,), jnp.int32)
            return z, z, jnp.zeros((n_out,), jnp.float32)
        s = jnp.arange(n_out, dtype=jnp.float32) * (n_in - 1) / (n_out - 1)
        i0 = jnp.clip(jnp.floor(s).astype(jnp.int32), 0, n_in - 1)
        i1 = jnp.clip(i0 + 1, 0, n_in - 1)
        return i0, i1, s - i0.astype(jnp.float32)

    y0, y1, wy = coords(H, Ho)
    x0, x1, wx = coords(W, Wo)
    xh = (x[:, y0, :, :] * (1.0 - wy)[None, :, None, None]
          + x[:, y1, :, :] * wy[None, :, None, None])
    return (xh[:, :, x0, :] * (1.0 - wx)[None, None, :, None]
            + xh[:, :, x1, :] * wx[None, None, :, None])


def ref_conv_bn_relu(x_nhwc, w_oihw, scale, bias):
    w_hwio = jnp.transpose(w_oihw, (2, 3, 1, 0))
    y = jax.lax.conv_general_dilated(
        x_nhwc, w_hwio, window_strides=(1, 1), padding="SAME",
        dimension_numbers=("NHWC", "HWIO", "NHWC"))
    return jnp.maximum(y * scale + bias, 0.0)


def up_forward_ref(x1_nchw, x2_nchw, p):
    x1 = jnp.transpose(x1_nchw, (0, 2, 3, 1)).astype(jnp.float32)
    x2 = jnp.transpose(x2_nchw, (0, 2, 3, 1)).astype(jnp.float32)
    x1 = bilinear_upsample_x2_align_corners(x1)
    dy = x2.shape[1] - x1.shape[1]
    dx = x2.shape[2] - x1.shape[2]
    x1 = jnp.pad(x1, ((0, 0), (dy // 2, dy - dy // 2), (dx // 2, dx - dx // 2), (0, 0)))
    x = jnp.concatenate([x2, x1], axis=-1)
    x = ref_conv_bn_relu(x, p["w1_oihw"], p["s1"], p["b1"])
    x = ref_conv_bn_relu(x, p["w2_oihw"], p["s2"], p["b2"])
    return jnp.transpose(x, (0, 3, 1, 2))


if __name__ == "__main__":
    key = jax.random.PRNGKey(0)
    k1, k2, kp = jax.random.split(key, 3)

    # Up(c_in=8, c_out=8): x1 has 4 channels at half resolution, x2 has 4 channels.
    x1 = jax.random.normal(k1, (2, 4, 8, 8), jnp.float32)     # NCHW
    x2 = jax.random.normal(k2, (2, 4, 16, 16), jnp.float32)   # NCHW
    params = init_up_params(c_in=8, c_out=8, key=kp)
    prep = prepare_up(params, x1.shape, x2.shape)

    out = jax.block_until_ready(up_forward(x1, x2, prep))     # nb=N: one grid step
    ref = jax.block_until_ready(up_forward_ref(x1, x2, params))

    assert out.shape == (2, 8, 16, 16), out.shape
    # bf16 MXU operands (f32 accumulation) vs f32 reference -> relaxed tolerance.
    if not np.allclose(np.asarray(out), np.asarray(ref), atol=5e-2, rtol=5e-2):
        raise AssertionError("Pallas output mismatch vs JAX reference")
    print("KERNEL_OK")
</pallas_src>

<mosaic_0001>
module attributes {stable_mosaic.version = 11 : i64} {
  func.func @up_kernel(%arg0: i32, %arg1: memref<1x38x64xbf16, #tpu.memory_space<vmem>>, %arg2: memref<1x16x32xf32, #tpu.memory_space<vmem>>, %arg3: memref<38x16xf32, #tpu.memory_space<vmem>>, %arg4: memref<3x96x128xbf16, #tpu.memory_space<vmem>>, %arg5: memref<1x128xf32, #tpu.memory_space<vmem>>, %arg6: memref<3x128x128xbf16, #tpu.memory_space<vmem>>, %arg7: memref<1x128xf32, #tpu.memory_space<vmem>>, %arg8: memref<36x1xf32, #tpu.memory_space<vmem>>, %arg9: memref<1x36x128xf32, #tpu.memory_space<vmem>>, %arg10: memref<38x96xbf16, #tpu.memory_space<vmem>>, %arg11: memref<38x128xbf16, #tpu.memory_space<vmem>>) attributes {dimension_semantics = [#tpu.dimension_semantics<parallel>], iteration_bounds = array<i64: 1>, scalar_prefetch = 0 : i64, scratch_operands = 2 : i64, tpu.core_type = #tpu.core_type<tc>, window_params = [{transform_indices = @transform_0, window_bounds = array<i64: 1, 38, 64>}, {transform_indices = @transform_1, window_bounds = array<i64: 1, 16, 32>}, {pipeline_mode = #tpu.pipeline_mode<synchronous>, transform_indices = @transform_2, window_bounds = array<i64: 38, 16>}, {pipeline_mode = #tpu.pipeline_mode<synchronous>, transform_indices = @transform_3, window_bounds = array<i64: 3, 96, 128>}, {pipeline_mode = #tpu.pipeline_mode<synchronous>, transform_indices = @transform_4, window_bounds = array<i64: 1, 128>}, {pipeline_mode = #tpu.pipeline_mode<synchronous>, transform_indices = @transform_5, window_bounds = array<i64: 3, 128, 128>}, {pipeline_mode = #tpu.pipeline_mode<synchronous>, transform_indices = @transform_6, window_bounds = array<i64: 1, 128>}, {pipeline_mode = #tpu.pipeline_mode<synchronous>, transform_indices = @transform_7, window_bounds = array<i64: 36, 1>}, {transform_indices = @transform_8, window_bounds = array<i64: 1, 36, 128>}]} {
    %c0 = arith.constant 0 : index
    %c0_0 = arith.constant 0 : index
    %c0_1 = arith.constant 0 : index
    %0 = vector.load %arg1[%c0, %c0_0, %c0_1] : memref<1x38x64xbf16, #tpu.memory_space<vmem>>, vector<1x38x64xbf16>
    %1 = vector.shape_cast %0 : vector<1x38x64xbf16> to vector<38x64xbf16>
    %c0_2 = arith.constant 0 : index
    %c0_3 = arith.constant 0 : index
    %2 = vector.load %arg10[%c0_2, %c0_3] : memref<38x96xbf16, #tpu.memory_space<vmem>>, vector<38x64xbf16>
    tpu.vector_store %arg10[%c0_2, %c0_3], %1 {strides = array<i32>} : memref<38x96xbf16, #tpu.memory_space<vmem>>, vector<38x64xbf16>,
    %c0_4 = arith.constant 0 : index
    %c0_5 = arith.constant 0 : index
    %3 = vector.load %arg3[%c0_4, %c0_5] : memref<38x16xf32, #tpu.memory_space<vmem>>, vector<38x16xf32>
    %c0_6 = arith.constant 0 : index
    %c0_7 = arith.constant 0 : index
    %c0_8 = arith.constant 0 : index
    %4 = vector.load %arg2[%c0_6, %c0_7, %c0_8] : memref<1x16x32xf32, #tpu.memory_space<vmem>>, vector<1x16x32xf32>
    %5 = vector.shape_cast %4 : vector<1x16x32xf32> to vector<16x32xf32>
    %cst = arith.constant dense<0.000000e+00> : vector<38x32xf32>
    %6 = tpu.matmul %3, %5, %cst {dimension_numbers = #tpu.dot_dimension_numbers<[1], [0], [0], [1], [0, 0, 1, 1], [], []>} : vector<38x16xf32>, vector<16x32xf32>, vector<38x32xf32> -> vector<38x32xf32>
    %7 = arith.truncf %6 : vector<38x32xf32> to vector<38x32xbf16>
    %c0_9 = arith.constant 0 : index
    %c64 = arith.constant 64 : index
    %8 = vector.load %arg10[%c0_9, %c64] : memref<38x96xbf16, #tpu.memory_space<vmem>>, vector<38x32xbf16>
    tpu.vector_store %arg10[%c0_9, %c64], %7 {strides = array<i32>} : memref<38x96xbf16, #tpu.memory_space<vmem>>, vector<38x32xbf16>,
    %cst_10 = arith.constant 0.000000e+00 : f32
    %9 = vector.broadcast %cst_10 : f32 to vector<36x128xf32>
    %c0_11 = arith.constant 0 : index
    %c0_12 = arith.constant 0 : index
    %10 = vector.load %arg10[%c0_11, %c0_12] : memref<38x96xbf16, #tpu.memory_space<vmem>>, vector<36x96xbf16>
    %c0_13 = arith.constant 0 : index
    %c0_14 = arith.constant 0 : index
    %c0_15 = arith.constant 0 : index
    %11 = vector.load %arg4[%c0_13, %c0_14, %c0_15] : memref<3x96x128xbf16, #tpu.memory_space<vmem>>, vector<1x96x128xbf16>
    %12 = vector.shape_cast %11 : vector<1x96x128xbf16> to vector<96x128xbf16>
    %cst_16 = arith.constant dense<0.000000e+00> : vector<36x128xf32>
    %13 = tpu.matmul %10, %12, %cst_16 {dimension_numbers = #tpu.dot_dimension_numbers<[1], [0], [0], [1], [0, 0, 1, 1], [], []>} : vector<36x96xbf16>, vector<96x128xbf16>, vector<36x128xf32> -> vector<36x128xf32>
    %14 = arith.addf %9, %13 : vector<36x128xf32>
    %c1 = arith.constant 1 : index
    %c0_17 = arith.constant 0 : index
    %15 = vector.load %arg10[%c1, %c0_17] : memref<38x96xbf16, #tpu.memory_space<vmem>>, vector<36x96xbf16>
    %c1_18 = arith.constant 1 : index
    %c0_19 = arith.constant 0 : index
    %c0_20 = arith.constant 0 : index
    %16 = vector.load %arg4[%c1_18, %c0_19, %c0_20] : memref<3x96x128xbf16, #tpu.memory_space<vmem>>, vector<1x96x128xbf16>
    %17 = vector.shape_cast %16 : vector<1x96x128xbf16> to vector<96x128xbf16>
    %cst_21 = arith.constant dense<0.000000e+00> : vector<36x128xf32>
    %18 = tpu.matmul %15, %17, %cst_21 {dimension_numbers = #tpu.dot_dimension_numbers<[1], [0], [0], [1], [0, 0, 1, 1], [], []>} : vector<36x96xbf16>, vector<96x128xbf16>, vector<36x128xf32> -> vector<36x128xf32>
    %19 = arith.addf %14, %18 : vector<36x128xf32>
    %c2 = arith.constant 2 : index
    %c0_22 = arith.constant 0 : index
    %20 = vector.load %arg10[%c2, %c0_22] : memref<38x96xbf16, #tpu.memory_space<vmem>>, vector<36x96xbf16>
    %c2_23 = arith.constant 2 : index
    %c0_24 = arith.constant 0 : index
    %c0_25 = arith.constant 0 : index
    %21 = vector.load %arg4[%c2_23, %c0_24, %c0_25] : memref<3x96x128xbf16, #tpu.memory_space<vmem>>, vector<1x96x128xbf16>
    %22 = vector.shape_cast %21 : vector<1x96x128xbf16> to vector<96x128xbf16>
    %cst_26 = arith.constant dense<0.000000e+00> : vector<36x128xf32>
    %23 = tpu.matmul %20, %22, %cst_26 {dimension_numbers = #tpu.dot_dimension_numbers<[1], [0], [0], [1], [0, 0, 1, 1], [], []>} : vector<36x96xbf16>, vector<96x128xbf16>, vector<36x128xf32> -> vector<36x128xf32>
    %24 = arith.addf %19, %23 : vector<36x128xf32>
    %c0_27 = arith.constant 0 : index
    %c0_28 = arith.constant 0 : index
    %25 = vector.load %arg5[%c0_27, %c0_28] : memref<1x128xf32, #tpu.memory_space<vmem>>, vector<1x128xf32>
    %26 = vector.broadcast %25 : vector<1x128xf32> to vector<36x128xf32>
    %27 = arith.addf %24, %26 : vector<36x128xf32>
    %cst_29 = arith.constant 0.000000e+00 : f32
    %28 = vector.broadcast %cst_29 : f32 to vector<36x128xf32>
    %29 = arith.maximumf %27, %28 : vector<36x128xf32>
    %c0_30 = arith.constant 0 : index
    %c0_31 = arith.constant 0 : index
    %30 = vector.load %arg8[%c0_30, %c0_31] : memref<36x1xf32, #tpu.memory_space<vmem>>, vector<36x1xf32>
    %31 = vector.broadcast %30 : vector<36x1xf32> to vector<36x128xf32>
    %32 = arith.mulf %29, %31 : vector<36x128xf32>
    %cst_32 = arith.constant 0.000000e+00 : bf16
    %33 = vector.broadcast %cst_32 : bf16 to vector<1x128xbf16>
    %c0_33 = arith.constant 0 : index
    %c0_34 = arith.constant 0 : index
    %34 = vector.load %arg11[%c0_33, %c0_34] : memref<38x128xbf16, #tpu.memory_space<vmem>>, vector<1x128xbf16>
    tpu.vector_store %arg11[%c0_33, %c0_34], %33 {strides = array<i32>} : memref<38x128xbf16, #tpu.memory_space<vmem>>, vector<1x128xbf16>,
    %cst_35 = arith.constant 0.000000e+00 : bf16
    %35 = vector.broadcast %cst_35 : bf16 to vector<1x128xbf16>
    %c37 = arith.constant 37 : index
    %c0_36 = arith.constant 0 : index
    %36 = vector.load %arg11[%c37, %c0_36] : memref<38x128xbf16, #tpu.memory_space<vmem>>, vector<1x128xbf16>
    tpu.vector_store %arg11[%c37, %c0_36], %35 {strides = array<i32>} : memref<38x128xbf16, #tpu.memory_space<vmem>>, vector<1x128xbf16>,
    %37 = arith.truncf %32 : vector<36x128xf32> to vector<36x128xbf16>
    %c1_37 = arith.constant 1 : index
    %c0_38 = arith.constant 0 : index
    %38 = vector.load %arg11[%c1_37, %c0_38] : memref<38x128xbf16, #tpu.memory_space<vmem>>, vector<36x128xbf16>
    tpu.vector_store %arg11[%c1_37, %c0_38], %37 {strides = array<i32>} : memref<38x128xbf16, #tpu.memory_space<vmem>>, vector<36x128xbf16>,
    %cst_39 = arith.constant 0.000000e+00 : f32
    %39 = vector.broadcast %cst_39 : f32 to vector<36x128xf32>
    %c0_40 = arith.constant 0 : index
    %c0_41 = arith.constant 0 : index
    %40 = vector.load %arg11[%c0_40, %c0_41] : memref<38x128xbf16, #tpu.memory_space<vmem>>, vector<36x128xbf16>
    %c0_42 = arith.constant 0 : index
    %c0_43 = arith.constant 0 : index
    %c0_44 = arith.constant 0 : index
    %41 = vector.load %arg6[%c0_42, %c0_43, %c0_44] : memref<3x128x128xbf16, #tpu.memory_space<vmem>>, vector<1x128x128xbf16>
    %42 = vector.shape_cast %41 : vector<1x128x128xbf16> to vector<128x128xbf16>
    %cst_45 = arith.constant dense<0.000000e+00> : vector<36x128xf32>
    %43 = tpu.matmul %40, %42, %cst_45 {dimension_numbers = #tpu.dot_dimension_numbers<[1], [0], [0], [1], [0, 0, 1, 1], [], []>} : vector<36x128xbf16>, vector<128x128xbf16>, vector<36x128xf32> -> vector<36x128xf32>
    %44 = arith.addf %39, %43 : vector<36x128xf32>
    %c1_46 = arith.constant 1 : index
    %c0_47 = arith.constant 0 : index
    %45 = vector.load %arg11[%c1_46, %c0_47] : memref<38x128xbf16, #tpu.memory_space<vmem>>, vector<36x128xbf16>
    %c1_48 = arith.constant 1 : index
    %c0_49 = arith.constant 0 : index
    %c0_50 = arith.constant 0 : index
    %46 = vector.load %arg6[%c1_48, %c0_49, %c0_50] : memref<3x128x128xbf16, #tpu.memory_space<vmem>>, vector<1x128x128xbf16>
    %47 = vector.shape_cast %46 : vector<1x128x128xbf16> to vector<128x128xbf16>
    %cst_51 = arith.constant dense<0.000000e+00> : vector<36x128xf32>
    %48 = tpu.matmul %45, %47, %cst_51 {dimension_numbers = #tpu.dot_dimension_numbers<[1], [0], [0], [1], [0, 0, 1, 1], [], []>} : vector<36x128xbf16>, vector<128x128xbf16>, vector<36x128xf32> -> vector<36x128xf32>
    %49 = arith.addf %44, %48 : vector<36x128xf32>
    %c2_52 = arith.constant 2 : index
    %c0_53 = arith.constant 0 : index
    %50 = vector.load %arg11[%c2_52, %c0_53] : memref<38x128xbf16, #tpu.memory_space<vmem>>, vector<36x128xbf16>
    %c2_54 = arith.constant 2 : index
    %c0_55 = arith.constant 0 : index
    %c0_56 = arith.constant 0 : index
    %51 = vector.load %arg6[%c2_54, %c0_55, %c0_56] : memref<3x128x128xbf16, #tpu.memory_space<vmem>>, vector<1x128x128xbf16>
    %52 = vector.shape_cast %51 : vector<1x128x128xbf16> to vector<128x128xbf16>
    %cst_57 = arith.constant dense<0.000000e+00> : vector<36x128xf32>
    %53 = tpu.matmul %50, %52, %cst_57 {dimension_numbers = #tpu.dot_dimension_numbers<[1], [0], [0], [1], [0, 0, 1, 1], [], []>} : vector<36x128xbf16>, vector<128x128xbf16>, vector<36x128xf32> -> vector<36x128xf32>
    %54 = arith.addf %49, %53 : vector<36x128xf32>
    %c0_58 = arith.constant 0 : index
    %c0_59 = arith.constant 0 : index
    %55 = vector.load %arg7[%c0_58, %c0_59] : memref<1x128xf32, #tpu.memory_space<vmem>>, vector<1x128xf32>
    %56 = vector.broadcast %55 : vector<1x128xf32> to vector<36x128xf32>
    %57 = arith.addf %54, %56 : vector<36x128xf32>
    %cst_60 = arith.constant 0.000000e+00 : f32
    %58 = vector.broadcast %cst_60 : f32 to vector<36x128xf32>
    %59 = arith.maximumf %57, %58 : vector<36x128xf32>
    %c0_61 = arith.constant 0 : index
    %c0_62 = arith.constant 0 : index
    %c0_63 = arith.constant 0 : index
    %60 = vector.load %arg9[%c0_61, %c0_62, %c0_63] : memref<1x36x128xf32, #tpu.memory_space<vmem>>, vector<1x36x128xf32>
    %61 = vector.shape_cast %60 : vector<1x36x128xf32> to vector<36x128xf32>
    %62 = vector.shape_cast %59 : vector<36x128xf32> to vector<1x36x128xf32>
    tpu.vector_store %arg9[%c0_61, %c0_62, %c0_63], %62 {strides = array<i32>} : memref<1x36x128xf32, #tpu.memory_space<vmem>>, vector<1x36x128xf32>,
    return
  }
  func.func @transform_0(%arg0: i32) -> (i32, i32, i32) {
    %c0_i32 = arith.constant 0 : i32
    %c0_i32_0 = arith.constant 0 : i32
    %c0_i32_1 = arith.constant 0 : i32
    return %arg0, %c0_i32, %c0_i32_0 : i32, i32, i32
  }
  func.func @transform_1(%arg0: i32) -> (i32, i32, i32) {
    %c0_i32 = arith.constant 0 : i32
    %c0_i32_0 = arith.constant 0 : i32
    %c0_i32_1 = arith.constant 0 : i32
    return %arg0, %c0_i32, %c0_i32_0 : i32, i32, i32
  }
  func.func @transform_2(%arg0: i32) -> (i32, i32) {
    %c0_i32 = arith.constant 0 : i32
    %c0_i32_0 = arith.constant 0 : i32
    %c0_i32_1 = arith.constant 0 : i32
    return %c0_i32, %c0_i32_0 : i32, i32
  }
  func.func @transform_3(%arg0: i32) -> (i32, i32, i32) {
    %c0_i32 = arith.constant 0 : i32
    %c0_i32_0 = arith.constant 0 : i32
    %c0_i32_1 = arith.constant 0 : i32
    %c0_i32_2 = arith.constant 0 : i32
    return %c0_i32, %c0_i32_0, %c0_i32_1 : i32, i32, i32
  }
  func.func @transform_4(%arg0: i32) -> (i32, i32) {
    %c0_i32 = arith.constant 0 : i32
    %c0_i32_0 = arith.constant 0 : i32
    %c0_i32_1 = arith.constant 0 : i32
    return %c0_i32, %c0_i32_0 : i32, i32
  }
  func.func @transform_5(%arg0: i32) -> (i32, i32, i32) {
    %c0_i32 = arith.constant 0 : i32
    %c0_i32_0 = arith.constant 0 : i32
    %c0_i32_1 = arith.constant 0 : i32
    %c0_i32_2 = arith.constant 0 : i32
    return %c0_i32, %c0_i32_0, %c0_i32_1 : i32, i32, i32
  }
  func.func @transform_6(%arg0: i32) -> (i32, i32) {
    %c0_i32 = arith.constant 0 : i32
    %c0_i32_0 = arith.constant 0 : i32
    %c0_i32_1 = arith.constant 0 : i32
    return %c0_i32, %c0_i32_0 : i32, i32
  }
  func.func @transform_7(%arg0: i32) -> (i32, i32) {
    %c0_i32 = arith.constant 0 : i32
    %c0_i32_0 = arith.constant 0 : i32
    %c0_i32_1 = arith.constant 0 : i32
    return %c0_i32, %c0_i32_0 : i32, i32
  }
  func.func @transform_8(%arg0: i32) -> (i32, i32, i32) {
    %c0_i32 = arith.constant 0 : i32
    %c0_i32_0 = arith.constant 0 : i32
    %c0_i32_1 = arith.constant 0 : i32
    return %arg0, %c0_i32, %c0_i32_0 : i32, i32, i32
  }
}

</mosaic_0001>

<llo_original>
// kernel: tpu_custom_call.1
$region0: #{tpu_custom_call.1}
  #allocation0 [shape = 'u32[]', space=smem, size = 0x4, offset = 0x4, fixed_abs, tag = 'smem constant byte address 0x4 - core index']
  #allocation1 [shape = 'u32[144,128]{1,0:T(1,128)}', space=vmem, size = 0x12000, scoped, tag = 'internal scratch']
  #allocation2 [shape = 'bf16[38,96]{1,0:T(8,128)(2,1)}', space=vmem, size = 0x2800, scoped, tag = 'scratch operand']
  #allocation3 [shape = 'bf16[38,128]{1,0:T(8,128)(2,1)}', space=vmem, size = 0x2800, scoped, tag = 'scratch operand']
  %s0 = inlined_call_operand.vmem [shape: bf16[1,38,64], index: 0, kind: input, shape index: {}]
  %s1 = inlined_call_operand.vmem [shape: f32[1,16,32], index: 1, kind: input, shape index: {}]
  %s2 = inlined_call_operand.vmem [shape: f32[38,16], index: 2, kind: input, shape index: {}]
  %s3 = inlined_call_operand.hbm [shape: bf16[3,96,128], index: 3, kind: input, shape index: {}]
  %s4 = inlined_call_operand.vmem [shape: f32[1,128], index: 4, kind: input, shape index: {}]
  %s5 = inlined_call_operand.hbm [shape: bf16[3,128,128], index: 5, kind: input, shape index: {}]
  %s6 = inlined_call_operand.vmem [shape: f32[1,128], index: 6, kind: input, shape index: {}]
  %s7 = inlined_call_operand.vmem [shape: f32[36,1], index: 7, kind: input, shape index: {}]
  %s8 = inlined_call_operand.vmem [shape: f32[1,36,128], index: 8, kind: output, shape index: {}]
  %s9 = sld [smem:[#allocation0]]
  $region50: #{tpu_custom_call.1} parent=0
    _
  %s11 = ssub.s32 1, %s9
  %s12 = scalar_select 0, %s11, %s9
  $region1: #{tpu_custom_call.1} parent=0
    #allocation4 [shape = 'u8[73728]{0}', space=vmem, size = 0x12000, scoped, tag = 'input window, operand 3, single buffered']
    #allocation5 [shape = 's32[1]{0}', space=sflag, size = 0x4, scoped, tag = 'scoped memory for tpu_custom_call.1']
    #allocation6 [shape = 'u8[98304]{0}', space=vmem, size = 0x18000, scoped, tag = 'input window, operand 5, single buffered']
    #allocation7 [shape = 's32[1]{0}', space=sflag, size = 0x4, scoped, tag = 'scoped memory for tpu_custom_call.1']
    %13 = vsyncpa [#allocation5], 0
    %14 = vsyncpa [#allocation7], 0
    // Predicated region
    $region2: #{tpu_custom_call.1} parent=1 // pred_check
      _
    $region3: #{tpu_custom_call.1} parent=1 // pred_check_branch
      %16 = sbr.rel (0) target = $region5
    $region4: #{tpu_custom_call.1} parent=1 // pred_region
      _
    $region5: #{tpu_custom_call.1} parent=1 // pred_fallthru
      _
    // Predicated region
    $region6: #{tpu_custom_call.1} parent=1 // pred_check
      _
    $region7: #{tpu_custom_call.1} parent=1 // pred_check_branch
      %18 = sbr.rel (0) target = $region9
    $region8: #{tpu_custom_call.1} parent=1 // pred_region
      _
    $region9: #{tpu_custom_call.1} parent=1 // pred_fallthru
      _
    // Predicated region
    $region10: #{tpu_custom_call.1} parent=1 // pred_check
      _
    $region11: #{tpu_custom_call.1} parent=1 // pred_check_branch
      %20 = sbr.rel (0) target = $region13
    $region12: #{tpu_custom_call.1} parent=1 // pred_region
      _
    $region13: #{tpu_custom_call.1} parent=1 // pred_fallthru
      _
    // Predicated region
    $region14: #{tpu_custom_call.1} parent=1 // pred_check
      _
    $region15: #{tpu_custom_call.1} parent=1 // pred_check_branch
      %22 = sbr.rel (0) target = $region17
    $region16: #{tpu_custom_call.1} parent=1 // pred_region
      %s24 = ssub.s32 2304, 2304
      %25 = vsyncadd [#allocation5], %s24
      %s26 = sshll.u32 [#allocation4], 4
      %s27 = int_to_ptr.vmem [resolvable:$true] %s26
      %32 = dma.hbm_to_vmem [thread:$0]  %s3, 2304, %s27, [#allocation5], 64, 64, 4
    $region17: #{tpu_custom_call.1} parent=1 // pred_fallthru
      _
    // Predicated region
    $region18: #{tpu_custom_call.1} parent=1 // pred_check
      _
    $region19: #{tpu_custom_call.1} parent=1 // pred_check_branch
      %34 = sbr.rel (0) target = $region21
    $region20: #{tpu_custom_call.1} parent=1 // pred_region
      _
    $region21: #{tpu_custom_call.1} parent=1 // pred_fallthru
      _
    // Predicated region
    $region22: #{tpu_custom_call.1} parent=1 // pred_check
      _
    $region23: #{tpu_custom_call.1} parent=1 // pred_check_branch
      %36 = sbr.rel (0) target = $region25
    $region24: #{tpu_custom_call.1} parent=1 // pred_region
      %s38 = ssub.s32 3072, 3072
      %39 = vsyncadd [#allocation7], %s38
      %s40 = sshll.u32 [#allocation6], 4
      %s41 = int_to_ptr.vmem [resolvable:$true] %s40
      %46 = dma.hbm_to_vmem [thread:$0]  %s5, 3072, %s41, [#allocation7], 64, 64, 4
    $region25: #{tpu_custom_call.1} parent=1 // pred_fallthru
      _
    // Predicated region
    $region26: #{tpu_custom_call.1} parent=1 // pred_check
      _
    $region27: #{tpu_custom_call.1} parent=1 // pred_check_branch
      %48 = sbr.rel (0) target = $region29
    $region28: #{tpu_custom_call.1} parent=1 // pred_region
      _
    $region29: #{tpu_custom_call.1} parent=1 // pred_fallthru
      _
    // Predicated region
    $region30: #{tpu_custom_call.1} parent=1 // pred_check
      _
    $region31: #{tpu_custom_call.1} parent=1 // pred_check_branch
      %50 = sbr.rel (0) target = $region33
    $region32: #{tpu_custom_call.1} parent=1 // pred_region
      _
    $region33: #{tpu_custom_call.1} parent=1 // pred_fallthru
      _
    // Predicated region
    $region34: #{tpu_custom_call.1} parent=1 // pred_check
      _
    $region35: #{tpu_custom_call.1} parent=1 // pred_check_branch
      %52 = sbr.rel (0) target = $region37
    $region36: #{tpu_custom_call.1} parent=1 // pred_region
      %53 = dma.done [#allocation5], 2304
    $region37: #{tpu_custom_call.1} parent=1 // pred_fallthru
      _
    // Predicated region
    $region38: #{tpu_custom_call.1} parent=1 // pred_check
      _
    $region39: #{tpu_custom_call.1} parent=1 // pred_check_branch
      %55 = sbr.rel (0) target = $region41
    $region40: #{tpu_custom_call.1} parent=1 // pred_region
      %56 = dma.done [#allocation7], 3072
    $region41: #{tpu_custom_call.1} parent=1 // pred_fallthru
      _
    %v58 = vld [vmem:[%s0] sm:$0xf]
    %v59 = vld [vmem:[%s0 + $0x4] sm:$0xf]
    %v60 = vld [vmem:[%s0 + $0x8] sm:$0xf]
    %v61 = vld [vmem:[%s0 + $0xc] sm:$0xf]
    %v62 = vld [vmem:[%s0 + $0x10] sm:$0x7]
    %vm63 = vcmask 519168
    %64 = vst.msk [vmem:[#allocation2] sm:$0xf] %vm63, %v58
    %65 = vst.msk [vmem:[#allocation2 + $0x4] sm:$0xf] %vm63, %v59
    %66 = vst.msk [vmem:[#allocation2 + $0x8] sm:$0xf] %vm63, %v60
    %67 = vst.msk [vmem:[#allocation2 + $0xc] sm:$0xf] %vm63, %v61
    %vm68 = vcmask 518144
    %69 = vst.msk [vmem:[#allocation2 + $0x10] sm:$0x7] %vm68, %v62
    %v70 = vld [vmem:[%s2] sm:$0xff]
    %v71 = vld [vmem:[%s2 + $0x8] sm:$0xff]
    %v72 = vld [vmem:[%s2 + $0x10] sm:$0xff]
    %v73 = vld [vmem:[%s2 + $0x18] sm:$0xff]
    %v74 = vld [vmem:[%s2 + $0x20] sm:$0x3f]
    %v75 = vld [vmem:[%s1] sm:$0xff]
    %v76 = vld [vmem:[%s1 + $0x8] sm:$0xff]
    %vm77 = vcmask 130048
    %v79 = vsel %vm77, %v70, 0
    %v82 = vsel %vm77, %v71, 0
    %v85 = vsel %vm77, %v72, 0
    %v88 = vsel %vm77, %v73, 0
    %v91 = vsel %vm77, %v74, 0
    %93 = vmatprep.subr.mxu0 0.0
    %94 = vmatpush1.msra.mxu0 %v75
    %95 = vmatprep.subr.mxu0 0.0
    %96 = vmatpush1.msra.mxu0 %v76
    %97 = vmatprep.subr.mxu0 0.0
    %98 = vmatpush1.msra.mxu0 0.0
    %99 = vmatprep.subr.mxu0 0.0
    %100 = vmatpush1.msra.mxu0 0.0
    %101 = vmatprep.subr.mxu0 0.0
    %102 = vmatpush1.msra.mxu0 0.0
    %103 = vmatprep.subr.mxu0 0.0
    %104 = vmatpush1.msra.mxu0 0.0
    %105 = vmatprep.subr.mxu0 0.0
    %106 = vmatpush1.msra.mxu0 0.0
    %107 = vmatprep.subr.mxu0 0.0
    %108 = vmatpush1.msra.mxu0 0.0
    %109 = vmatprep.subr.mxu0 0.0
    %110 = vmatpush1.msra.mxu0 0.0
    %111 = vmatprep.subr.mxu0 0.0
    %112 = vmatpush1.msra.mxu0 0.0
    %113 = vmatprep.subr.mxu0 0.0
    %114 = vmatpush1.msra.mxu0 0.0
    %115 = vmatprep.subr.mxu0 0.0
    %116 = vmatpush1.msra.mxu0 0.0
    %117 = vmatprep.subr.mxu0 0.0
    %118 = vmatpush1.msra.mxu0 0.0
    %119 = vmatprep.subr.mxu0 0.0
    %120 = vmatpush1.msra.mxu0 0.0
    %121 = vmatprep.subr.mxu0 0.0
    %122 = vmatpush1.msra.mxu0 0.0
    %123 = vmatprep.subr.mxu0 0.0
    %124 = vmatpush1.msra.mxu0 0.0
    %125 = vmatprep.subr.mxu0 0.0
    %126 = vmatpush1.msra.mxu0 0.0
    %127 = vmatprep.subr.mxu0 0.0
    %128 = vmatpush1.msra.mxu0 0.0
    %129 = vmatprep.subr.mxu0 0.0
    %130 = vmatpush1.msra.mxu0 0.0
    %131 = vmatprep.subr.mxu0 0.0
    %132 = vmatpush1.msra.mxu0 0.0
    %133 = vmatprep.subr.mxu0 0.0
    %134 = vmatpush1.msra.mxu0 0.0
    %135 = vmatprep.subr.mxu0 0.0
    %136 = vmatpush1.msra.mxu0 0.0
    %137 = vmatprep.subr.mxu0 0.0
    %138 = vmatpush1.msra.mxu0 0.0
    %139 = vmatprep.subr.mxu0 0.0
    %140 = vmatpush1.msra.mxu0 0.0
    %141 = vmatprep.subr.mxu0 0.0
    %142 = vmatpush1.msra.mxu0 0.0
    %143 = vmatprep.subr.mxu0 0.0
    %144 = vmatpush1.msra.mxu0 0.0
    %145 = vmatprep.subr.mxu0 0.0
    %146 = vmatpush1.msra.mxu0 0.0
    %147 = vmatprep.subr.mxu0 0.0
    %148 = vmatpush1.msra.mxu0 0.0
    %149 = vmatprep.subr.mxu0 0.0
    %150 = vmatpush1.msra.mxu0 0.0
    %151 = vmatprep.subr.mxu0 0.0
    %152 = vmatpush1.msra.mxu0 0.0
    %153 = vmatprep.subr.mxu0 0.0
    %154 = vmatpush1.msra.mxu0 0.0
    %155 = vmatprep.subr.mxu0 0.0
    %156 = vmatpush1.msra.mxu0 0.0
    %157 = vmatprep.mubr.f32.mxu0 0.0
    %158 = vmatmul.mubr.f32.gmra.mrb[0].mxu0 %v79
    %v159 = vpop.f32.mrb[0].mxu0
    %v160 = vadd.f32 0.0, %v159
    %v161 = vpop.f32.mrb[0].mxu0
    %162 = vmatprep.mubr.f32.mxu0 0.0
    %163 = vmatmul.mubr.f32.gmra.mrb[0].mxu0 %v82
    %v164 = vpop.f32.mrb[0].mxu0
    %v165 = vadd.f32 0.0, %v164
    %v166 = vpop.f32.mrb[0].mxu0
    %167 = vmatprep.mubr.f32.mxu0 0.0
    %168 = vmatmul.mubr.f32.gmra.mrb[0].mxu0 %v85
    %v169 = vpop.f32.mrb[0].mxu0
    %v170 = vadd.f32 0.0, %v169
    %v171 = vpop.f32.mrb[0].mxu0
    %172 = vmatprep.mubr.f32.mxu0 0.0
    %173 = vmatmul.mubr.f32.gmra.mrb[0].mxu0 %v88
    %v174 = vpop.f32.mrb[0].mxu0
    %v175 = vadd.f32 0.0, %v174
    %v176 = vpop.f32.mrb[0].mxu0
    %177 = vmatprep.mubr.f32.mxu0 0.0
    %178 = vmatmul.mubr.f32.gmra.mrb[0].mxu0 %v91
    %v179 = vpop.f32.mrb[0].mxu0
    %v180 = vadd.f32 0.0, %v179
    %v181 = vpop.f32.mrb[0].mxu0
    %182 = vdwg.mxu0
    %v183 = vpack.c.bf16 %v165, %v160
    %v184 = vpack.c.bf16 %v175, %v170
    %v185 = vpack.c.bf16 %v180, %v180
    %v189 = vunpack.c.l.b16 %v183
    %v190 = vunpack.c.h.b16 %v183
    %v191 = vunpack.c.l.b16 %v184
    %v192 = vunpack.c.h.b16 %v184
    %v193 = vunpack.c.l.b16 %v185
    %v194 = vpack.c.b16 %v189, %v189
    %v195 = vpack.c.b16 %v190, %v190
    %v196 = vpack.c.b16 %v191, %v191
    %v197 = vpack.c.b16 %v192, %v192
    %v198 = vpack.c.b16 %v193, %v193
    %199 = vrot.lane.b32.xlu0 %v194, 64
    %v200 = vpop.permute.xlu0 %199
    %201 = vrot.lane.b32.xlu0 %v195, 64
    %v202 = vpop.permute.xlu0 %201
    %203 = vrot.lane.b32.xlu0 %v196, 64
    %v204 = vpop.permute.xlu0 %203
    %205 = vrot.lane.b32.xlu0 %v197, 64
    %v206 = vpop.permute.xlu0 %205
    %207 = vrot.lane.b32.xlu0 %v198, 64
    %v208 = vpop.permute.xlu0 %207
    %vm214 = vcmask 781824
    %215 = vst.msk [vmem:[#allocation2] sm:$0xf] %vm214, %v200
    %216 = vst.msk [vmem:[#allocation2 + $0x4] sm:$0xf] %vm214, %v202
    %217 = vst.msk [vmem:[#allocation2 + $0x8] sm:$0xf] %vm214, %v204
    %218 = vst.msk [vmem:[#allocation2 + $0xc] sm:$0xf] %vm214, %v206
    %vm219 = vcmask 780800
    %220 = vst.msk [vmem:[#allocation2 + $0x10] sm:$0x7] %vm219, %v208
    %v221 = vld [vmem:[#allocation2] sm:$0xf]
    %v222 = vld [vmem:[#allocation2 + $0x4] sm:$0xf]
    %v223 = vld [vmem:[#allocation2 + $0x8] sm:$0xf]
    %v224 = vld [vmem:[#allocation2 + $0xc] sm:$0xf]
    %v225 = vld [vmem:[#allocation2 + $0x10] sm:$0x3]
    %v226 = vld [vmem:[#allocation4] sm:$0xf]
    %v227 = vld [vmem:[#allocation4 + $0x4] sm:$0xf]
    %v228 = vld [vmem:[#allocation4 + $0x8] sm:$0xf]
    %v229 = vld [vmem:[#allocation4 + $0xc] sm:$0xf]
    %v230 = vld [vmem:[#allocation4 + $0x10] sm:$0xf]
    %v231 = vld [vmem:[#allocation4 + $0x14] sm:$0xf]
    %v232 = vld [vmem:[#allocation4 + $0x18] sm:$0xf]
    %v233 = vld [vmem:[#allocation4 + $0x1c] sm:$0xf]
    %v234 = vld [vmem:[#allocation4 + $0x20] sm:$0xf]
    %v235 = vld [vmem:[#allocation4 + $0x24] sm:$0xf]
    %v236 = vld [vmem:[#allocation4 + $0x28] sm:$0xf]
    %v237 = vld [vmem:[#allocation4 + $0x2c] sm:$0xf]
    %v238 = vld [vmem:[#allocation2 + $0x10] sm:$0x7]
    %s239 = scalar_lea.vmem [#allocation4], 48
    %v240 = vld [vmem:[%s239] sm:$0xf]
    %v241 = vld [vmem:[%s239 + $0x4] sm:$0xf]
    %v242 = vld [vmem:[%s239 + $0x8] sm:$0xf]
    %v243 = vld [vmem:[%s239 + $0xc] sm:$0xf]
    %v244 = vld [vmem:[%s239 + $0x10] sm:$0xf]
    %v245 = vld [vmem:[%s239 + $0x14] sm:$0xf]
    %v246 = vld [vmem:[%s239 + $0x18] sm:$0xf]
    %v247 = vld [vmem:[%s239 + $0x1c] sm:$0xf]
    %v248 = vld [vmem:[%s239 + $0x20] sm:$0xf]
    %v249 = vld [vmem:[%s239 + $0x24] sm:$0xf]
    %v250 = vld [vmem:[%s239 + $0x28] sm:$0xf]
    %v251 = vld [vmem:[%s239 + $0x2c] sm:$0xf]
    %v257 = vunpack.c.l.b16 %v221
    %v258 = vunpack.c.l.b16 %v222
    %v259 = vunpack.c.l.b16 %v223
    %v260 = vunpack.c.l.b16 %v224
    %v261 = vunpack.c.l.b16 %v238
    %v262 = vpack.c.b16 %v258, %v257
    %v263 = vpack.c.b16 %v260, %v259
    %v264 = vpack.c.b16 %v261, %v261
    %vm265 = vsmask.f32 7424
    %v267 = vshrl.u32 %v262, 16
    %v269 = vshll.u32 %v262, 16
    %v271 = vrot.slane %v269, 1
    %v272 = vor.u32 %v267, %v271
    %v274 = vshll.u32 %v263, 16
    %v276 = vrot.slane %v274, 1
    %v277 = vsel %vm265, %v272, %v276
    %v278 = vshrl.u32 %v263, 16
    %v280 = vor.u32 %v278, %v276
    %v282 = vshll.u32 %v264, 16
    %v284 = vrot.slane %v282, 1
    %v285 = vsel %vm265, %v280, %v284
    %v286 = vshrl.u32 %v264, 16
    %v288 = vor.u32 %v286, %v284
    %v301 = vunpack.c.l.b16 %v240
    %v302 = vunpack.c.l.b16 %v241
    %v303 = vunpack.c.l.b16 %v242
    %v304 = vunpack.c.l.b16 %v243
    %v305 = vunpack.c.l.b16 %v244
    %v306 = vunpack.c.l.b16 %v245
    %v307 = vunpack.c.l.b16 %v246
    %v308 = vunpack.c.l.b16 %v247
    %v309 = vunpack.c.l.b16 %v248
    %v310 = vunpack.c.l.b16 %v249
    %v311 = vunpack.c.l.b16 %v250
    %v312 = vunpack.c.l.b16 %v251
    %v313 = vpack.c.b16 %v302, %v301
    %v314 = vpack.c.b16 %v304, %v303
    %v315 = vpack.c.b16 %v306, %v305
    %v316 = vpack.c.b16 %v308, %v307
    %v317 = vpack.c.b16 %v310, %v309
    %v318 = vpack.c.b16 %v312, %v311
    %vm325 = vcmask 785408
    %v327 = vsel %vm325, %v277, 0
    %v330 = vsel %vm325, %v285, 0
    %v333 = vsel %vm325, %v288, 0
    %335 = vmatprep.subr.bf16.mxu0 0
    %336 = vmatpush1.bf16.msra.mxu0 %v313
    %337 = vmatprep.subr.bf16.mxu0 0
    %338 = vmatpush1.bf16.msra.mxu0 %v314
    %339 = vmatprep.subr.bf16.mxu0 0
    %340 = vmatpush1.bf16.msra.mxu0 %v315
    %341 = vmatprep.subr.bf16.mxu0 0
    %342 = vmatpush1.bf16.msra.mxu0 %v316
    %343 = vmatprep.subr.bf16.mxu0 0
    %344 = vmatpush1.bf16.msra.mxu0 %v317
    %345 = vmatprep.subr.bf16.mxu0 0
    %346 = vmatpush1.bf16.msra.mxu0 %v318
    %347 = vmatprep.subr.bf16.mxu0 0
    %348 = vmatpush1.bf16.msra.mxu0 0
    %349 = vmatprep.subr.bf16.mxu0 0
    %350 = vmatpush1.bf16.msra.mxu0 0
    %351 = vmatprep.subr.bf16.mxu0 0
    %352 = vmatpush1.bf16.msra.mxu0 0
    %353 = vmatprep.subr.bf16.mxu0 0
    %354 = vmatpush1.bf16.msra.mxu0 0
    %355 = vmatprep.subr.bf16.mxu0 0
    %356 = vmatpush1.bf16.msra.mxu0 0
    %357 = vmatprep.subr.bf16.mxu0 0
    %358 = vmatpush1.bf16.msra.mxu0 0
    %359 = vmatprep.subr.bf16.mxu0 0
    %360 = vmatpush1.bf16.msra.mxu0 0
    %361 = vmatprep.subr.bf16.mxu0 0
    %362 = vmatpush1.bf16.msra.mxu0 0
    %363 = vmatprep.subr.bf16.mxu0 0
    %364 = vmatpush1.bf16.msra.mxu0 0
    %365 = vmatprep.subr.bf16.mxu0 0
    %366 = vmatpush1.bf16.msra.mxu0 0
    %367 = vmatprep.mubr.bf16.mxu0 0
    %368 = vmatmul.mubr.bf16.gmra.mrb[0].mxu0 %v327
    %v369 = vpop.f32.mrb[0].mxu0
    %v370 = vadd.f32 0.0, %v369
    %v371 = vpop.f32.mrb[0].mxu0
    %v372 = vpop.f32.mrb[0].mxu0
    %v373 = vadd.f32 0.0, %v372
    %v374 = vpop.f32.mrb[0].mxu0
    %375 = vmatprep.mubr.bf16.mxu0 0
    %376 = vmatmul.mubr.bf16.gmra.mrb[0].mxu0 %v330
    %v377 = vpop.f32.mrb[0].mxu0
    %v378 = vadd.f32 0.0, %v377
    %v379 = vpop.f32.mrb[0].mxu0
    %v380 = vpop.f32.mrb[0].mxu0
    %v381 = vadd.f32 0.0, %v380
    %v382 = vpop.f32.mrb[0].mxu0
    %383 = vmatprep.mubr.bf16.mxu0 0
    %384 = vmatmul.mubr.bf16.gmra.mrb[0].mxu0 %v333
    %v385 = vpop.f32.mrb[0].mxu0
    %v386 = vadd.f32 0.0, %v385
    %v387 = vpop.f32.mrb[0].mxu0
    %v388 = vpop.f32.mrb[0].mxu0
    %v389 = vpop.f32.mrb[0].mxu0
    %390 = vdwg.mxu0
    %v392 = vunpack.c.l.b16 %v225
    %v393 = vpack.c.b16 %v392, %v392
    %v406 = vunpack.c.l.b16 %v226
    %v407 = vunpack.c.l.b16 %v227
    %v408 = vunpack.c.l.b16 %v228
    %v409 = vunpack.c.l.b16 %v229
    %v410 = vunpack.c.l.b16 %v230
    %v411 = vunpack.c.l.b16 %v231
    %v412 = vunpack.c.l.b16 %v232
    %v413 = vunpack.c.l.b16 %v233
    %v414 = vunpack.c.l.b16 %v234
    %v415 = vunpack.c.l.b16 %v235
    %v416 = vunpack.c.l.b16 %v236
    %v417 = vunpack.c.l.b16 %v237
    %v418 = vpack.c.b16 %v407, %v406
    %v419 = vpack.c.b16 %v409, %v408
    %v420 = vpack.c.b16 %v411, %v410
    %v421 = vpack.c.b16 %v413, %v412
    %v422 = vpack.c.b16 %v415, %v414
    %v423 = vpack.c.b16 %v417, %v416
    %v430 = vsel %vm325, %v262, 0
    %v432 = vsel %vm325, %v263, 0
    %v435 = vsel %vm325, %v393, 0
    %437 = vmatprep.subr.bf16.mxu0 0
    %438 = vmatpush1.bf16.msra.mxu0 %v418
    %439 = vmatprep.subr.bf16.mxu0 0
    %440 = vmatpush1.bf16.msra.mxu0 %v419
    %441 = vmatprep.subr.bf16.mxu0 0
    %442 = vmatpush1.bf16.msra.mxu0 %v420
    %443 = vmatprep.subr.bf16.mxu0 0
    %444 = vmatpush1.bf16.msra.mxu0 %v421
    %445 = vmatprep.subr.bf16.mxu0 0
    %446 = vmatpush1.bf16.msra.mxu0 %v422
    %447 = vmatprep.subr.bf16.mxu0 0
    %448 = vmatpush1.bf16.msra.mxu0 %v423
    %449 = vmatprep.subr.bf16.mxu0 0
    %450 = vmatpush1.bf16.msra.mxu0 0
    %451 = vmatprep.subr.bf16.mxu0 0
    %452 = vmatpush1.bf16.msra.mxu0 0
    %453 = vmatprep.subr.bf16.mxu0 0
    %454 = vmatpush1.bf16.msra.mxu0 0
    %455 = vmatprep.subr.bf16.mxu0 0
    %456 = vmatpush1.bf16.msra.mxu0 0
    %457 = vmatprep.subr.bf16.mxu0 0
    %458 = vmatpush1.bf16.msra.mxu0 0
    %459 = vmatprep.subr.bf16.mxu0 0
    %460 = vmatpush1.bf16.msra.mxu0 0
    %461 = vmatprep.subr.bf16.mxu0 0
    %462 = vmatpush1.bf16.msra.mxu0 0
    %463 = vmatprep.subr.bf16.mxu0 0
    %464 = vmatpush1.bf16.msra.mxu0 0
    %465 = vmatprep.subr.bf16.mxu0 0
    %466 = vmatpush1.bf16.msra.mxu0 0
    %467 = vmatprep.subr.bf16.mxu0 0
    %468 = vmatpush1.bf16.msra.mxu0 0
    %469 = vmatprep.mubr.bf16.mxu0 0
    %470 = vmatmul.mubr.bf16.gmra.mrb[0].mxu0 %v430
    %v471 = vpop.f32.mrb[0].mxu0
    %v472 = vadd.f32 %v370, %v471
    %v473 = vpop.f32.mrb[0].mxu0
    %v474 = vpop.f32.mrb[0].mxu0
    %v475 = vadd.f32 %v373, %v474
    %v476 = vpop.f32.mrb[0].mxu0
    %477 = vmatprep.mubr.bf16.mxu0 0
    %478 = vmatmul.mubr.bf16.gmra.mrb[0].mxu0 %v432
    %v479 = vpop.f32.mrb[0].mxu0
    %v480 = vadd.f32 %v378, %v479
    %v481 = vpop.f32.mrb[0].mxu0
    %v482 = vpop.f32.mrb[0].mxu0
    %v483 = vadd.f32 %v381, %v482
    %v484 = vpop.f32.mrb[0].mxu0
    %485 = vmatprep.mubr.bf16.mxu0 0
    %486 = vmatmul.mubr.bf16.gmra.mrb[0].mxu0 %v435
    %v487 = vpop.f32.mrb[0].mxu0
    %v488 = vadd.f32 %v386, %v487
    %v489 = vpop.f32.mrb[0].mxu0
    %v490 = vpop.f32.mrb[0].mxu0
    %v491 = vpop.f32.mrb[0].mxu0
    %492 = vdwg.mxu0
    %v493 = vld [vmem:[#allocation2] sm:$0xe]
    %s494 = scalar_lea.vmem [#allocation4], 96
    %v495 = vld [vmem:[%s494] sm:$0xf]
    %v496 = vld [vmem:[%s494 + $0x4] sm:$0xf]
    %v497 = vld [vmem:[%s494 + $0x8] sm:$0xf]
    %v498 = vld [vmem:[%s494 + $0xc] sm:$0xf]
    %v499 = vld [vmem:[%s494 + $0x10] sm:$0xf]
    %v500 = vld [vmem:[%s494 + $0x14] sm:$0xf]
    %v501 = vld [vmem:[%s494 + $0x18] sm:$0xf]
    %v502 = vld [vmem:[%s494 + $0x1c] sm:$0xf]
    %v503 = vld [vmem:[%s494 + $0x20] sm:$0xf]
    %v504 = vld [vmem:[%s494 + $0x24] sm:$0xf]
    %v505 = vld [vmem:[%s494 + $0x28] sm:$0xf]
    %v506 = vld [vmem:[%s494 + $0x2c] sm:$0xf]
    %v508 = vunpack.c.l.b16 %v493
    %v509 = vpack.c.b16 %v258, %v508
    %vm510 = vcmask 1046528
    %v511 = vrot.slane %v509, 1
    %v512 = vrot.slane %v263, 1
    %v513 = vsel %vm510, %v511, %v512
    %v514 = vrot.slane %v264, 1
    %v515 = vsel %vm510, %v512, %v514
    %v528 = vunpack.c.l.b16 %v495
    %v529 = vunpack.c.l.b16 %v496
    %v530 = vunpack.c.l.b16 %v497
    %v531 = vunpack.c.l.b16 %v498
    %v532 = vunpack.c.l.b16 %v499
    %v533 = vunpack.c.l.b16 %v500
    %v534 = vunpack.c.l.b16 %v501
    %v535 = vunpack.c.l.b16 %v502
    %v536 = vunpack.c.l.b16 %v503
    %v537 = vunpack.c.l.b16 %v504
    %v538 = vunpack.c.l.b16 %v505
    %v539 = vunpack.c.l.b16 %v506
    %v540 = vpack.c.b16 %v529, %v528
    %v541 = vpack.c.b16 %v531, %v530
    %v542 = vpack.c.b16 %v533, %v532
    %v543 = vpack.c.b16 %v535, %v534
    %v544 = vpack.c.b16 %v537, %v536
    %v545 = vpack.c.b16 %v539, %v538
    %v553 = vsel %vm325, %v513, 0
    %v556 = vsel %vm325, %v515, 0
    %v559 = vsel %vm325, %v514, 0
    %561 = vmatprep.subr.bf16.mxu0 0
    %562 = vmatpush1.bf16.msra.mxu0 %v540
    %563 = vmatprep.subr.bf16.mxu0 0
    %564 = vmatpush1.bf16.msra.mxu0 %v541
    %565 = vmatprep.subr.bf16.mxu0 0
    %566 = vmatpush1.bf16.msra.mxu0 %v542
    %567 = vmatprep.subr.bf16.mxu0 0
    %568 = vmatpush1.bf16.msra.mxu0 %v543
    %569 = vmatprep.subr.bf16.mxu0 0
    %570 = vmatpush1.bf16.msra.mxu0 %v544
    %571 = vmatprep.subr.bf16.mxu0 0
    %572 = vmatpush1.bf16.msra.mxu0 %v545
    %573 = vmatprep.subr.bf16.mxu0 0
    %574 = vmatpush1.bf16.msra.mxu0 0
    %575 = vmatprep.subr.bf16.mxu0 0
    %576 = vmatpush1.bf16.msra.mxu0 0
    %577 = vmatprep.subr.bf16.mxu0 0
    %578 = vmatpush1.bf16.msra.mxu0 0
    %579 = vmatprep.subr.bf16.mxu0 0
    %580 = vmatpush1.bf16.msra.mxu0 0
    %581 = vmatprep.subr.bf16.mxu0 0
    %582 = vmatpush1.bf16.msra.mxu0 0
    %583 = vmatprep.subr.bf16.mxu0 0
    %584 = vmatpush1.bf16.msra.mxu0 0
    %585 = vmatprep.subr.bf16.mxu0 0
    %586 = vmatpush1.bf16.msra.mxu0 0
    %587 = vmatprep.subr.bf16.mxu0 0
    %588 = vmatpush1.bf16.msra.mxu0 0
    %589 = vmatprep.subr.bf16.mxu0 0
    %590 = vmatpush1.bf16.msra.mxu0 0
    %591 = vmatprep.subr.bf16.mxu0 0
    %592 = vmatpush1.bf16.msra.mxu0 0
    %593 = vmatprep.mubr.bf16.mxu0 0
    %594 = vmatmul.mubr.bf16.gmra.mrb[0].mxu0 %v553
    %v595 = vpop.f32.mrb[0].mxu0
    %v596 = vadd.f32 0.0, %v595
    %v597 = vpop.f32.mrb[0].mxu0
    %v598 = vpop.f32.mrb[0].mxu0
    %v599 = vadd.f32 0.0, %v598
    %v600 = vpop.f32.mrb[0].mxu0
    %601 = vmatprep.mubr.bf16.mxu0 0
    %602 = vmatmul.mubr.bf16.gmra.mrb[0].mxu0 %v556
    %v603 = vpop.f32.mrb[0].mxu0
    %v604 = vadd.f32 0.0, %v603
    %v605 = vpop.f32.mrb[0].mxu0
    %v606 = vpop.f32.mrb[0].mxu0
    %v607 = vadd.f32 0.0, %v606
    %v608 = vpop.f32.mrb[0].mxu0
    %609 = vmatprep.mubr.bf16.mxu0 0
    %610 = vmatmul.mubr.bf16.gmra.mrb[0].mxu0 %v559
    %v611 = vpop.f32.mrb[0].mxu0
    %v612 = vadd.f32 0.0, %v611
    %v613 = vpop.f32.mrb[0].mxu0
    %v614 = vpop.f32.mrb[0].mxu0
    %v615 = vpop.f32.mrb[0].mxu0
    %616 = vdwg.mxu0
    %v617 = vadd.f32 %v472, %v596
    %v618 = vadd.f32 %v475, %v599
    %v619 = vadd.f32 %v480, %v604
    %v620 = vadd.f32 %v483, %v607
    %v621 = vadd.f32 %v488, %v612
    %v622 = vld [vmem:[%s4] sm:$0x1]
    %v624 = vlaneseq
    %v625 = vshrl.u32 %v624, 7
    %v626 = vsub.s32 0, %v625
    %v627 = vrot.slane %v622, %v626
    %v629 = vadd.f32 %v617, %v627
    %v630 = vadd.f32 %v618, %v627
    %v631 = vadd.f32 %v619, %v627
    %v632 = vadd.f32 %v620, %v627
    %v633 = vadd.f32 %v621, %v627
    %v634 = vmax.f32 %v629, 0.0
    %v635 = vmax.f32 %v630, 0.0
    %v636 = vmax.f32 %v631, 0.0
    %v637 = vmax.f32 %v632, 0.0
    %v638 = vmax.f32 %v633, 0.0
    %v639 = vld [vmem:[%s7] sm:$0xff]
    %v640 = vld [vmem:[%s7 + $0x8] sm:$0xff]
    %v641 = vld [vmem:[%s7 + $0x10] sm:$0xff]
    %v642 = vld [vmem:[%s7 + $0x18] sm:$0xff]
    %v643 = vld [vmem:[%s7 + $0x20] sm:$0xf]
    %645 = vset.pattern.permute.xlu0 0
    %646 = vperm.xlu0 %645, %v639
    %v647 = vpop.permute.xlu0 %646
    %650 = vset.pattern.permute.xlu0 0
    %651 = vperm.xlu0 %650, %v640
    %v652 = vpop.permute.xlu0 %651
    %655 = vset.pattern.permute.xlu0 0
    %656 = vperm.xlu0 %655, %v641
    %v657 = vpop.permute.xlu0 %656
    %660 = vset.pattern.permute.xlu0 0
    %661 = vperm.xlu0 %660, %v642
    %v662 = vpop.permute.xlu0 %661
    %665 = vset.pattern.permute.xlu0 0
    %666 = vperm.xlu0 %665, %v643
    %v667 = vpop.permute.xlu0 %666
    %v669 = vmul.f32 %v634, %v647
    %v670 = vmul.f32 %v635, %v652
    %v671 = vmul.f32 %v636, %v657
    %v672 = vmul.f32 %v637, %v662
    %v673 = vmul.f32 %v638, %v667
    %vm674 = vcmask 1040384
    %vm675 = vsmask.f32 256
    %vm676 = vmand %vm674, %vm675
    %v677 = vld [vmem:[#allocation3] sm:$0x1]
    %v678 = vsel %vm676, 0, %v677
    %679 = vst [vmem:[#allocation3] sm:$0x1] %v678
    %vm680 = vcmask 1042434
    %vm681 = vsmask.f32 7946
    %vm682 = vmand %vm680, %vm681
    %v683 = vld [vmem:[#allocation3 + $0x10] sm:$0x4]
    %v684 = vsel %vm682, 0, %v683
    %685 = vst [vmem:[#allocation3 + $0x10] sm:$0x4] %v684
    %v686 = vpack.c.bf16 %v670, %v669
    %v687 = vpack.c.bf16 %v672, %v671
    %v688 = vpack.c.bf16 %v673, %v673
    %v692 = vunpack.c.l.b16 %v686
    %v693 = vunpack.c.h.b16 %v686
    %v694 = vunpack.c.l.b16 %v687
    %v695 = vunpack.c.h.b16 %v687
    %v696 = vunpack.c.l.b16 %v688
    %v697 = vpack.c.b16 %v692, %v692
    %v698 = vpack.c.b16 %v693, %v693
    %v699 = vpack.c.b16 %v694, %v694
    %v700 = vpack.c.b16 %v695, %v695
    %v701 = vpack.c.b16 %v696, %v696
    %vm702 = vsmask.f32 4368
    %vm703 = vmor %vm675, %vm702
    %v705 = vshrl.u32 %v697, 16
    %v707 = vrot.slane %v705, 7
    %v708 = vshll.u32 %v697, 16
    %v710 = vor.u32 %v707, %v708
    %v711 = vrot.slane %v707, 4
    %v713 = vshrl.u32 %v698, 16
    %v715 = vrot.slane %v713, 7
    %v716 = vshll.u32 %v698, 16
    %v718 = vor.u32 %v715, %v716
    %v719 = vsel %vm703, %v711, %v718
    %v720 = vrot.slane %v715, 4
    %v722 = vshrl.u32 %v699, 16
    %v724 = vrot.slane %v722, 7
    %v725 = vshll.u32 %v699, 16
    %v727 = vor.u32 %v724, %v725
    %v728 = vsel %vm703, %v720, %v727
    %v729 = vrot.slane %v724, 4
    %v731 = vshrl.u32 %v700, 16
    %v733 = vrot.slane %v731, 7
    %v734 = vshll.u32 %v700, 16
    %v736 = vor.u32 %v733, %v734
    %v737 = vsel %vm703, %v729, %v736
    %v738 = vrot.slane %v733, 4
    %v740 = vshrl.u32 %v701, 16
    %v742 = vrot.slane %v740, 7
    %v743 = vshll.u32 %v701, 16
    %v745 = vor.u32 %v742, %v743
    %v746 = vsel %vm703, %v738, %v745
    %vm752 = vcmask 1043456
    %vm753 = vsmask.f32 7938
    %vm754 = vmand %vm752, %vm753
    %v755 = vld [vmem:[#allocation3] sm:$0xf]
    %v756 = vsel %vm754, %v710, %v755
    %757 = vst [vmem:[#allocation3] sm:$0xf] %v756
    %758 = vst [vmem:[#allocation3 + $0x4] sm:$0xf] %v719
    %759 = vst [vmem:[#allocation3 + $0x8] sm:$0xf] %v728
    %760 = vst [vmem:[#allocation3 + $0xc] sm:$0xf] %v737
    %vm761 = vcmask 1042432
    %vm762 = vsmask.f32 2304
    %vm763 = vmand %vm761, %vm762
    %v764 = vld [vmem:[#allocation3 + $0x10] sm:$0x7]
    %v765 = vsel %vm763, %v746, %v764
    %766 = vst [vmem:[#allocation3 + $0x10] sm:$0x7] %v765
    %v767 = vld [vmem:[#allocation3] sm:$0xf]
    %v768 = vld [vmem:[#allocation3 + $0x4] sm:$0xf]
    %v769 = vld [vmem:[#allocation3 + $0x8] sm:$0xf]
    %v770 = vld [vmem:[#allocation3 + $0xc] sm:$0xf]
    %v771 = vld [vmem:[#allocation3 + $0x10] sm:$0x3]
    %v772 = vld [vmem:[#allocation6] sm:$0xf]
    %v773 = vld [vmem:[#allocation6 + $0x4] sm:$0xf]
    %v774 = vld [vmem:[#allocation6 + $0x8] sm:$0xf]
    %v775 = vld [vmem:[#allocation6 + $0xc] sm:$0xf]
    %v776 = vld [vmem:[#allocation6 + $0x10] sm:$0xf]
    %v777 = vld [vmem:[#allocation6 + $0x14] sm:$0xf]
    %v778 = vld [vmem:[#allocation6 + $0x18] sm:$0xf]
    %v779 = vld [vmem:[#allocation6 + $0x1c] sm:$0xf]
    %v780 = vld [vmem:[#allocation6 + $0x20] sm:$0xf]
    %v781 = vld [vmem:[#allocation6 + $0x24] sm:$0xf]
    %v782 = vld [vmem:[#allocation6 + $0x28] sm:$0xf]
    %v783 = vld [vmem:[#allocation6 + $0x2c] sm:$0xf]
    %v784 = vld [vmem:[#allocation6 + $0x30] sm:$0xf]
    %v785 = vld [vmem:[#allocation6 + $0x34] sm:$0xf]
    %v786 = vld [vmem:[#allocation6 + $0x38] sm:$0xf]
    %v787 = vld [vmem:[#allocation6 + $0x3c] sm:$0xf]
    %v788 = vld [vmem:[#allocation3 + $0x10] sm:$0x7]
    %s789 = scalar_lea.vmem [#allocation6], 64
    %v790 = vld [vmem:[%s789] sm:$0xf]
    %v791 = vld [vmem:[%s789 + $0x4] sm:$0xf]
    %v792 = vld [vmem:[%s789 + $0x8] sm:$0xf]
    %v793 = vld [vmem:[%s789 + $0xc] sm:$0xf]
    %v794 = vld [vmem:[%s789 + $0x10] sm:$0xf]
    %v795 = vld [vmem:[%s789 + $0x14] sm:$0xf]
    %v796 = vld [vmem:[%s789 + $0x18] sm:$0xf]
    %v797 = vld [vmem:[%s789 + $0x1c] sm:$0xf]
    %v798 = vld [vmem:[%s789 + $0x20] sm:$0xf]
    %v799 = vld [vmem:[%s789 + $0x24] sm:$0xf]
    %v800 = vld [vmem:[%s789 + $0x28] sm:$0xf]
    %v801 = vld [vmem:[%s789 + $0x2c] sm:$0xf]
    %v802 = vld [vmem:[%s789 + $0x30] sm:$0xf]
    %v803 = vld [vmem:[%s789 + $0x34] sm:$0xf]
    %v804 = vld [vmem:[%s789 + $0x38] sm:$0xf]
    %v805 = vld [vmem:[%s789 + $0x3c] sm:$0xf]
    %v811 = vunpack.c.l.b16 %v767
    %v812 = vunpack.c.l.b16 %v768
    %v813 = vunpack.c.l.b16 %v769
    %v814 = vunpack.c.l.b16 %v770
    %v815 = vunpack.c.l.b16 %v788
    %v816 = vpack.c.b16 %v812, %v811
    %v817 = vpack.c.b16 %v814, %v813
    %v818 = vpack.c.b16 %v815, %v815
    %v820 = vshrl.u32 %v816, 16
    %v822 = vshll.u32 %v816, 16
    %v824 = vrot.slane %v822, 1
    %v825 = vor.u32 %v820, %v824
    %v827 = vshll.u32 %v817, 16
    %v829 = vrot.slane %v827, 1
    %v830 = vsel %vm265, %v825, %v829
    %v831 = vshrl.u32 %v817, 16
    %v833 = vor.u32 %v831, %v829
    %v835 = vshll.u32 %v818, 16
    %v837 = vrot.slane %v835, 1
    %v838 = vsel %vm265, %v833, %v837
    %v839 = vshrl.u32 %v818, 16
    %v841 = vor.u32 %v839, %v837
    %v861 = vunpack.c.l.b16 %v790
    %v862 = vunpack.c.l.b16 %v791
    %v863 = vunpack.c.l.b16 %v792
    %v864 = vunpack.c.l.b16 %v793
    %v865 = vunpack.c.l.b16 %v794
    %v866 = vunpack.c.l.b16 %v795
    %v867 = vunpack.c.l.b16 %v796
    %v868 = vunpack.c.l.b16 %v797
    %v869 = vunpack.c.l.b16 %v798
    %v870 = vunpack.c.l.b16 %v799
    %v871 = vunpack.c.l.b16 %v800
    %v872 = vunpack.c.l.b16 %v801
    %v873 = vunpack.c.l.b16 %v802
    %v874 = vunpack.c.l.b16 %v803
    %v875 = vunpack.c.l.b16 %v804
    %v876 = vunpack.c.l.b16 %v805
    %v877 = vpack.c.b16 %v862, %v861
    %v878 = vpack.c.b16 %v864, %v863
    %v879 = vpack.c.b16 %v866, %v865
    %v880 = vpack.c.b16 %v868, %v867
    %v881 = vpack.c.b16 %v870, %v869
    %v882 = vpack.c.b16 %v872, %v871
    %v883 = vpack.c.b16 %v874, %v873
    %v884 = vpack.c.b16 %v876, %v875
    %893 = vmatprep.subr.bf16.mxu0 0
    %894 = vmatpush1.bf16.msra.mxu0 %v877
    %895 = vmatprep.subr.bf16.mxu0 0
    %896 = vmatpush1.bf16.msra.mxu0 %v878
    %897 = vmatprep.subr.bf16.mxu0 0
    %898 = vmatpush1.bf16.msra.mxu0 %v879
    %899 = vmatprep.subr.bf16.mxu0 0
    %900 = vmatpush1.bf16.msra.mxu0 %v880
    %901 = vmatprep.subr.bf16.mxu0 0
    %902 = vmatpush1.bf16.msra.mxu0 %v881
    %903 = vmatprep.subr.bf16.mxu0 0
    %904 = vmatpush1.bf16.msra.mxu0 %v882
    %905 = vmatprep.subr.bf16.mxu0 0
    %906 = vmatpush1.bf16.msra.mxu0 %v883
    %907 = vmatprep.subr.bf16.mxu0 0
    %908 = vmatpush1.bf16.msra.mxu0 %v884
    %909 = vmatprep.subr.bf16.mxu0 0
    %910 = vmatpush1.bf16.msra.mxu0 0
    %911 = vmatprep.subr.bf16.mxu0 0
    %912 = vmatpush1.bf16.msra.mxu0 0
    %913 = vmatprep.subr.bf16.mxu0 0
    %914 = vmatpush1.bf16.msra.mxu0 0
    %915 = vmatprep.subr.bf16.mxu0 0
    %916 = vmatpush1.bf16.msra.mxu0 0
    %917 = vmatprep.subr.bf16.mxu0 0
    %918 = vmatpush1.bf16.msra.mxu0 0
    %919 = vmatprep.subr.bf16.mxu0 0
    %920 = vmatpush1.bf16.msra.mxu0 0
    %921 = vmatprep.subr.bf16.mxu0 0
    %922 = vmatpush1.bf16.msra.mxu0 0
    %923 = vmatprep.subr.bf16.mxu0 0
    %924 = vmatpush1.bf16.msra.mxu0 0
    %925 = vmatprep.mubr.bf16.mxu0 0
    %926 = vmatmul.mubr.bf16.gmra.mrb[0].mxu0 %v830
    %v927 = vpop.f32.mrb[0].mxu0
    %v928 = vadd.f32 0.0, %v927
    %v929 = vpop.f32.mrb[0].mxu0
    %v930 = vpop.f32.mrb[0].mxu0
    %v931 = vadd.f32 0.0, %v930
    %v932 = vpop.f32.mrb[0].mxu0
    %933 = vmatprep.mubr.bf16.mxu0 0
    %934 = vmatmul.mubr.bf16.gmra.mrb[0].mxu0 %v838
    %v935 = vpop.f32.mrb[0].mxu0
    %v936 = vadd.f32 0.0, %v935
    %v937 = vpop.f32.mrb[0].mxu0
    %v938 = vpop.f32.mrb[0].mxu0
    %v939 = vadd.f32 0.0, %v938
    %v940 = vpop.f32.mrb[0].mxu0
    %941 = vmatprep.mubr.bf16.mxu0 0
    %942 = vmatmul.mubr.bf16.gmra.mrb[0].mxu0 %v841
    %v943 = vpop.f32.mrb[0].mxu0
    %v944 = vadd.f32 0.0, %v943
    %v945 = vpop.f32.mrb[0].mxu0
    %v946 = vpop.f32.mrb[0].mxu0
    %v947 = vpop.f32.mrb[0].mxu0
    %948 = vdwg.mxu0
    %v950 = vunpack.c.l.b16 %v771
    %v951 = vpack.c.b16 %v950, %v950
    %v971 = vunpack.c.l.b16 %v772
    %v972 = vunpack.c.l.b16 %v773
    %v973 = vunpack.c.l.b16 %v774
    %v974 = vunpack.c.l.b16 %v775
    %v975 = vunpack.c.l.b16 %v776
    %v976 = vunpack.c.l.b16 %v777
    %v977 = vunpack.c.l.b16 %v778
    %v978 = vunpack.c.l.b16 %v779
    %v979 = vunpack.c.l.b16 %v780
    %v980 = vunpack.c.l.b16 %v781
    %v981 = vunpack.c.l.b16 %v782
    %v982 = vunpack.c.l.b16 %v783
    %v983 = vunpack.c.l.b16 %v784
    %v984 = vunpack.c.l.b16 %v785
    %v985 = vunpack.c.l.b16 %v786
    %v986 = vunpack.c.l.b16 %v787
    %v987 = vpack.c.b16 %v972, %v971
    %v988 = vpack.c.b16 %v974, %v973
    %v989 = vpack.c.b16 %v976, %v975
    %v990 = vpack.c.b16 %v978, %v977
    %v991 = vpack.c.b16 %v980, %v979
    %v992 = vpack.c.b16 %v982, %v981
    %v993 = vpack.c.b16 %v984, %v983
    %v994 = vpack.c.b16 %v986, %v985
    %1003 = vmatprep.subr.bf16.mxu0 0
    %1004 = vmatpush1.bf16.msra.mxu0 %v987
    %1005 = vmatprep.subr.bf16.mxu0 0
    %1006 = vmatpush1.bf16.msra.mxu0 %v988
    %1007 = vmatprep.subr.bf16.mxu0 0
    %1008 = vmatpush1.bf16.msra.mxu0 %v989
    %1009 = vmatprep.subr.bf16.mxu0 0
    %1010 = vmatpush1.bf16.msra.mxu0 %v990
    %1011 = vmatprep.subr.bf16.mxu0 0
    %1012 = vmatpush1.bf16.msra.mxu0 %v991
    %1013 = vmatprep.subr.bf16.mxu0 0
    %1014 = vmatpush1.bf16.msra.mxu0 %v992
    %1015 = vmatprep.subr.bf16.mxu0 0
    %1016 = vmatpush1.bf16.msra.mxu0 %v993
    %1017 = vmatprep.subr.bf16.mxu0 0
    %1018 = vmatpush1.bf16.msra.mxu0 %v994
    %1019 = vmatprep.subr.bf16.mxu0 0
    %1020 = vmatpush1.bf16.msra.mxu0 0
    %1021 = vmatprep.subr.bf16.mxu0 0
    %1022 = vmatpush1.bf16.msra.mxu0 0
    %1023 = vmatprep.subr.bf16.mxu0 0
    %1024 = vmatpush1.bf16.msra.mxu0 0
    %1025 = vmatprep.subr.bf16.mxu0 0
    %1026 = vmatpush1.bf16.msra.mxu0 0
    %1027 = vmatprep.subr.bf16.mxu0 0
    %1028 = vmatpush1.bf16.msra.mxu0 0
    %1029 = vmatprep.subr.bf16.mxu0 0
    %1030 = vmatpush1.bf16.msra.mxu0 0
    %1031 = vmatprep.subr.bf16.mxu0 0
    %1032 = vmatpush1.bf16.msra.mxu0 0
    %1033 = vmatprep.subr.bf16.mxu0 0
    %1034 = vmatpush1.bf16.msra.mxu0 0
    %1035 = vmatprep.mubr.bf16.mxu0 0
    %1036 = vmatmul.mubr.bf16.gmra.mrb[0].mxu0 %v816
    %v1037 = vpop.f32.mrb[0].mxu0
    %v1038 = vadd.f32 %v928, %v1037
    %v1039 = vpop.f32.mrb[0].mxu0
    %v1040 = vpop.f32.mrb[0].mxu0
    %v1041 = vadd.f32 %v931, %v1040
    %v1042 = vpop.f32.mrb[0].mxu0
    %1043 = vmatprep.mubr.bf16.mxu0 0
    %1044 = vmatmul.mubr.bf16.gmra.mrb[0].mxu0 %v817
    %v1045 = vpop.f32.mrb[0].mxu0
    %v1046 = vadd.f32 %v936, %v1045
    %v1047 = vpop.f32.mrb[0].mxu0
    %v1048 = vpop.f32.mrb[0].mxu0
    %v1049 = vadd.f32 %v939, %v1048
    %v1050 = vpop.f32.mrb[0].mxu0
    %1051 = vmatprep.mubr.bf16.mxu0 0
    %1052 = vmatmul.mubr.bf16.gmra.mrb[0].mxu0 %v951
    %v1053 = vpop.f32.mrb[0].mxu0
    %v1054 = vadd.f32 %v944, %v1053
    %v1055 = vpop.f32.mrb[0].mxu0
    %v1056 = vpop.f32.mrb[0].mxu0
    %v1057 = vpop.f32.mrb[0].mxu0
    %1058 = vdwg.mxu0
    %v1059 = vld [vmem:[#allocation3] sm:$0xe]
    %s1060 = scalar_lea.vmem [#allocation6], 128
    %v1061 = vld [vmem:[%s1060] sm:$0xf]
    %v1062 = vld [vmem:[%s1060 + $0x4] sm:$0xf]
    %v1063 = vld [vmem:[%s1060 + $0x8] sm:$0xf]
    %v1064 = vld [vmem:[%s1060 + $0xc] sm:$0xf]
    %v1065 = vld [vmem:[%s1060 + $0x10] sm:$0xf]
    %v1066 = vld [vmem:[%s1060 + $0x14] sm:$0xf]
    %v1067 = vld [vmem:[%s1060 + $0x18] sm:$0xf]
    %v1068 = vld [vmem:[%s1060 + $0x1c] sm:$0xf]
    %v1069 = vld [vmem:[%s1060 + $0x20] sm:$0xf]
    %v1070 = vld [vmem:[%s1060 + $0x24] sm:$0xf]
    %v1071 = vld [vmem:[%s1060 + $0x28] sm:$0xf]
    %v1072 = vld [vmem:[%s1060 + $0x2c] sm:$0xf]
    %v1073 = vld [vmem:[%s1060 + $0x30] sm:$0xf]
    %v1074 = vld [vmem:[%s1060 + $0x34] sm:$0xf]
    %v1075 = vld [vmem:[%s1060 + $0x38] sm:$0xf]
    %v1076 = vld [vmem:[%s1060 + $0x3c] sm:$0xf]
    %v1078 = vunpack.c.l.b16 %v1059
    %v1079 = vpack.c.b16 %v812, %v1078
    %v1080 = vrot.slane %v1079, 1
    %v1081 = vrot.slane %v817, 1
    %v1082 = vsel %vm510, %v1080, %v1081
    %v1083 = vrot.slane %v818, 1
    %v1084 = vsel %vm510, %v1081, %v1083
    %v1104 = vunpack.c.l.b16 %v1061
    %v1105 = vunpack.c.l.b16 %v1062
    %v1106 = vunpack.c.l.b16 %v1063
    %v1107 = vunpack.c.l.b16 %v1064
    %v1108 = vunpack.c.l.b16 %v1065
    %v1109 = vunpack.c.l.b16 %v1066
    %v1110 = vunpack.c.l.b16 %v1067
    %v1111 = vunpack.c.l.b16 %v1068
    %v1112 = vunpack.c.l.b16 %v1069
    %v1113 = vunpack.c.l.b16 %v1070
    %v1114 = vunpack.c.l.b16 %v1071
    %v1115 = vunpack.c.l.b16 %v1072
    %v1116 = vunpack.c.l.b16 %v1073
    %v1117 = vunpack.c.l.b16 %v1074
    %v1118 = vunpack.c.l.b16 %v1075
    %v1119 = vunpack.c.l.b16 %v1076
    %v1120 = vpack.c.b16 %v1105, %v1104
    %v1121 = vpack.c.b16 %v1107, %v1106
    %v1122 = vpack.c.b16 %v1109, %v1108
    %v1123 = vpack.c.b16 %v1111, %v1110
    %v1124 = vpack.c.b16 %v1113, %v1112
    %v1125 = vpack.c.b16 %v1115, %v1114
    %v1126 = vpack.c.b16 %v1117, %v1116
    %v1127 = vpack.c.b16 %v1119, %v1118
    %1136 = vmatprep.subr.bf16.mxu0 0
    %1137 = vmatpush1.bf16.msra.mxu0 %v1120
    %1138 = vmatprep.subr.bf16.mxu0 0
    %1139 = vmatpush1.bf16.msra.mxu0 %v1121
    %1140 = vmatprep.subr.bf16.mxu0 0
    %1141 = vmatpush1.bf16.msra.mxu0 %v1122
    %1142 = vmatprep.subr.bf16.mxu0 0
    %1143 = vmatpush1.bf16.msra.mxu0 %v1123
    %1144 = vmatprep.subr.bf16.mxu0 0
    %1145 = vmatpush1.bf16.msra.mxu0 %v1124
    %1146 = vmatprep.subr.bf16.mxu0 0
    %1147 = vmatpush1.bf16.msra.mxu0 %v1125
    %1148 = vmatprep.subr.bf16.mxu0 0
    %1149 = vmatpush1.bf16.msra.mxu0 %v1126
    %1150 = vmatprep.subr.bf16.mxu0 0
    %1151 = vmatpush1.bf16.msra.mxu0 %v1127
    %1152 = vmatprep.subr.bf16.mxu0 0
    %1153 = vmatpush1.bf16.msra.mxu0 0
    %1154 = vmatprep.subr.bf16.mxu0 0
    %1155 = vmatpush1.bf16.msra.mxu0 0
    %1156 = vmatprep.subr.bf16.mxu0 0
    %1157 = vmatpush1.bf16.msra.mxu0 0
    %1158 = vmatprep.subr.bf16.mxu0 0
    %1159 = vmatpush1.bf16.msra.mxu0 0
    %1160 = vmatprep.subr.bf16.mxu0 0
    %1161 = vmatpush1.bf16.msra.mxu0 0
    %1162 = vmatprep.subr.bf16.mxu0 0
    %1163 = vmatpush1.bf16.msra.mxu0 0
    %1164 = vmatprep.subr.bf16.mxu0 0
    %1165 = vmatpush1.bf16.msra.mxu0 0
    %1166 = vmatprep.subr.bf16.mxu0 0
    %1167 = vmatpush1.bf16.msra.mxu0 0
    %1168 = vmatprep.mubr.bf16.mxu0 0
    %1169 = vmatmul.mubr.bf16.gmra.mrb[0].mxu0 %v1082
    %v1170 = vpop.f32.mrb[0].mxu0
    %v1171 = vadd.f32 0.0, %v1170
    %v1172 = vpop.f32.mrb[0].mxu0
    %v1173 = vpop.f32.mrb[0].mxu0
    %v1174 = vadd.f32 0.0, %v1173
    %v1175 = vpop.f32.mrb[0].mxu0
    %1176 = vmatprep.mubr.bf16.mxu0 0
    %1177 = vmatmul.mubr.bf16.gmra.mrb[0].mxu0 %v1084
    %v1178 = vpop.f32.mrb[0].mxu0
    %v1179 = vadd.f32 0.0, %v1178
    %v1180 = vpop.f32.mrb[0].mxu0
    %v1181 = vpop.f32.mrb[0].mxu0
    %v1182 = vadd.f32 0.0, %v1181
    %v1183 = vpop.f32.mrb[0].mxu0
    %1184 = vmatprep.mubr.bf16.mxu0 0
    %1185 = vmatmul.mubr.bf16.gmra.mrb[0].mxu0 %v1083
    %v1186 = vpop.f32.mrb[0].mxu0
    %v1187 = vadd.f32 0.0, %v1186
    %v1188 = vpop.f32.mrb[0].mxu0
    %v1189 = vpop.f32.mrb[0].mxu0
    %v1190 = vpop.f32.mrb[0].mxu0
    %1191 = vdwg.mxu0
    %v1192 = vadd.f32 %v1038, %v1171
    %v1193 = vadd.f32 %v1041, %v1174
    %v1194 = vadd.f32 %v1046, %v1179
    %v1195 = vadd.f32 %v1049, %v1182
    %v1196 = vadd.f32 %v1054, %v1187
    %v1197 = vld [vmem:[%s6] sm:$0x1]
    %v1199 = vlaneseq
    %v1200 = vshrl.u32 %v1199, 7
    %v1201 = vsub.s32 0, %v1200
    %v1202 = vrot.slane %v1197, %v1201
    %v1204 = vadd.f32 %v1192, %v1202
    %v1205 = vadd.f32 %v1193, %v1202
    %v1206 = vadd.f32 %v1194, %v1202
    %v1207 = vadd.f32 %v1195, %v1202
    %v1208 = vadd.f32 %v1196, %v1202
    %v1209 = vmax.f32 %v1204, 0.0
    %v1210 = vmax.f32 %v1205, 0.0
    %v1211 = vmax.f32 %v1206, 0.0
    %v1212 = vmax.f32 %v1207, 0.0
    %v1213 = vmax.f32 %v1208, 0.0
    %1214 = vst [vmem:[%s8] sm:$0xff] %v1209
    %1215 = vst [vmem:[%s8 + $0x8] sm:$0xff] %v1210
    %1216 = vst [vmem:[%s8 + $0x10] sm:$0xff] %v1211
    %1217 = vst [vmem:[%s8 + $0x18] sm:$0xff] %v1212
    %1218 = vst [vmem:[%s8 + $0x20] sm:$0xf] %v1213
    // Predicated region
    $region42: #{tpu_custom_call.1} parent=1 // pred_check
      _
    $region43: #{tpu_custom_call.1} parent=1 // pred_check_branch
      %1220 = sbr.rel (0) target = $region45
    $region44: #{tpu_custom_call.1} parent=1 // pred_region
      _
    $region45: #{tpu_custom_call.1} parent=1 // pred_fallthru
      _
    // Predicated region
    $region46: #{tpu_custom_call.1} parent=1 // pred_check
      _
    $region47: #{tpu_custom_call.1} parent=1 // pred_check_branch
      %1222 = sbr.rel (0) target = $region49
    $region48: #{tpu_custom_call.1} parent=1 // pred_region
      _
    $region49: #{tpu_custom_call.1} parent=1 // pred_fallthru
      _
    %1223 = vsyncpa [#allocation5], 1
    %1224 = vsyncpa [#allocation7], 1

</llo_original>
